<compile_context>
chip_gen: v7x
topology: tpu7x:2x2x1
jax: 0.10.0
libtpu: 0.0.40
codegen_flags: <defaults>
</compile_context>

<pallas_src>
import functools

import jax
import jax.numpy as jnp
from jax.experimental import pallas as pl
from jax.experimental.pallas import tpu as pltpu


# ---------------------------------------------------------------------------
# Hardware detection (once, at import time).
# ---------------------------------------------------------------------------
def _tpu_vmem_capacity():
    try:
        return int(pltpu.get_tpu_info().vmem_capacity_bytes)
    except Exception:
        return 64 << 20                       # conservative (v7x-sized) default


def _detect_v7x():
    try:
        kind = jax.devices()[0].device_kind.lower()
        return ("v7" in kind) or ("7x" in kind)
    except Exception:
        return False


_VMEM_CAP = _tpu_vmem_capacity()
_IS_V7X = _detect_v7x()
_BIG_VMEM = _VMEM_CAP >= (100 << 20)          # v5e / v6e: 128 MiB physical
# ~100 MiB on 128 MiB chips, ~56 MiB on v7x (64 MiB), never below 32 MiB.
_VMEM_LIMIT = max(min(_VMEM_CAP - (8 << 20), 100 << 20), 32 << 20)

if _IS_V7X:
    # Split token tiles across the two TensorCores on v7x.
    _DIM_SEMANTICS = (getattr(pltpu, "CORE_PARALLEL", "parallel"),
                      getattr(pltpu, "ARBITRARY", "arbitrary"))
else:
    _DIM_SEMANTICS = ("parallel", "arbitrary")


# ---------------------------------------------------------------------------
# Kernel
# ---------------------------------------------------------------------------
def _expert_kernel(x_ref, w1_ref, b1_ref, w2_ref, b2_ref, o_ref, acc_ref):
    # x_ref:  (tm, n_embd)        token tile
    # w1_ref: (n_embd, th)        fc1 weight slab (hidden columns of chunk k)
    # b1_ref: (n_chunks, th)      fc1 bias, fully resident (no per-step DMA)
    # w2_ref: (th, n_embd)        fc2 weight slab (hidden rows of chunk k)
    # b2_ref: (1, n_embd)         fc2 bias, resident
    # o_ref:  (tm, n_embd)        output tile (same block across the k axis)
    # acc_ref:(tm, n_embd) f32    VMEM accumulator
    th = w1_ref.shape[1]
    k = pl.program_id(1)

    @pl.when(k == 0)
    def _():
        acc_ref[...] = jnp.zeros_like(acc_ref)

    # fc1 chunk: keep inputs in their storage dtype, accumulate in f32 on MXU.
    h = jnp.dot(x_ref[...], w1_ref[...], preferred_element_type=jnp.float32)

    # b1 is resident in VMEM; pick the current hidden chunk in-kernel.
    if b1_ref.shape[0] == 1:                       # single hidden chunk
        b1c = b1_ref[...]
    else:
        b1c = b1_ref[pl.ds(k, 1), :]               # (1, th) row for chunk k
    h = h + b1c.astype(jnp.float32)

    # Exact (erf) GELU — matches torch.nn.functional.gelu default.
    h = 0.5 * h * (1.0 + jax.lax.erf(h * jnp.float32(0.7071067811865476)))

    # TODO(synk): training-mode dropout would use pltpu.prng_seed /
    # pltpu.prng_random_bits; identity here (eval semantics).

    # fc2 partial product for this hidden chunk, accumulated in f32.
    acc_ref[...] += jnp.dot(h.astype(w2_ref.dtype), w2_ref[...],
                            preferred_element_type=jnp.float32)

    @pl.when(k == pl.num_programs(1) - 1)
    def _():
        o_ref[...] = (acc_ref[...]
                      + b2_ref[...].astype(jnp.float32)).astype(o_ref.dtype)


# ---------------------------------------------------------------------------
# Tile selection
# ---------------------------------------------------------------------------
def _round_up(x, m):
    return (x + m - 1) // m * m


def _pick_th(hidden, th_req):
    """Hidden-chunk size: largest 128-aligned divisor of hidden <= cap."""
    if th_req is not None:
        if th_req <= 0 or hidden % th_req != 0:
            raise ValueError(f"th={th_req} must divide hidden={hidden}")
        return th_req
    th_cap = 1024 if _BIG_VMEM else 256            # tighter chunks on v7x
    if hidden % 128 == 0:
        best = 128
        d = 128
        while d <= min(th_cap, hidden):
            if hidden % d == 0:
                best = d
            d += 128
        return best
    if hidden <= 2048:
        # Small enough to hold the whole W1/W2 slabs in VMEM.
        return hidden
    raise ValueError(
        f"hidden={hidden} has no 128-aligned divisor <= {th_cap}; pad hidden "
        "or pass th explicitly")


def _pick_tm(M, n_embd, hidden, th, itemsize, sublane, tm_req):
    tm = tm_req if tm_req is not None else (512 if _BIG_VMEM else 384)
    tm = max(sublane, min(_round_up(tm, sublane), _round_up(M, sublane)))
    # Re-balance so the partial last tile is small (same number of weight
    # streams, less wasted MXU work on the tail).
    n_tiles = pl.cdiv(M, tm)
    tm = _round_up(pl.cdiv(M, n_tiles), sublane)

    def vmem_bytes(tm_):
        act = 2 * tm_ * n_embd * itemsize          # x tile (double buffered)
        act += 2 * tm_ * n_embd * itemsize         # out tile (double buffered)
        act += tm_ * n_embd * 4                    # f32 accumulator
        act += tm_ * th * 4                        # f32 `h` intermediate
        w = 2 * (n_embd * th + th * n_embd) * itemsize   # W1 + W2 double bufs
        bias = 2 * (hidden + n_embd) * itemsize
        return act + w + bias

    while tm > sublane and vmem_bytes(tm) > _VMEM_LIMIT:
        tm = _round_up(tm // 2, sublane)
    return tm


# ---------------------------------------------------------------------------
# Wrapper
# ---------------------------------------------------------------------------
@functools.partial(jax.jit, static_argnames=("tm", "th"))
def expert_layer(x, w1, b1, w2, b2, *, tm=None, th=None):
    """x: (batch, seq, n_embd); weights stored as (in, out) (i.e. PyTorch W.T)."""
    batch, seq, n_embd = x.shape
    hidden = w1.shape[1]
    M = batch * seq
    x2d = x.reshape(M, n_embd)

    # bf16 packs 16 rows per vreg sublane group, f32 packs 8.
    sublane = 16 if x.dtype == jnp.bfloat16 else 8
    th = _pick_th(hidden, th)
    tm = _pick_tm(M, n_embd, hidden, th, x.dtype.itemsize, sublane, tm)

    n_tok_tiles = pl.cdiv(M, tm)      # partial last tile handled by Pallas
    n_hid_chunks = hidden // th

    b1_2d = b1.reshape(n_hid_chunks, th)   # resident; row k = hidden chunk k
    b2_2d = b2.reshape(1, n_embd)

    cost = pl.CostEstimate(
        flops=4 * M * n_embd * hidden,                       # two matmuls
        transcendentals=M * hidden,                          # erf per h element
        bytes_accessed=int(x2d.size * x2d.dtype.itemsize
                           + w1.size * w1.dtype.itemsize
                           + w2.size * w2.dtype.itemsize
                           + b1.size * b1.dtype.itemsize
                           + b2.size * b2.dtype.itemsize
                           + M * n_embd * x.dtype.itemsize),
    )

    # NOTE: pipeline_mode=pl.Buffered(1) on the x tile would reclaim one
    # tm*n_embd buffer (its block index is constant across k); left at the
    # default for lowering compatibility — the weight slabs dominate VMEM.
    out2d = pl.pallas_call(
        _expert_kernel,
        out_shape=jax.ShapeDtypeStruct((M, n_embd), x.dtype),
        grid_spec=pltpu.PrefetchScalarGridSpec(
            num_scalar_prefetch=0,
            grid=(n_tok_tiles, n_hid_chunks),
            in_specs=[
                pl.BlockSpec((tm, n_embd), lambda i, k: (i, 0)),       # x tile
                pl.BlockSpec((n_embd, th), lambda i, k: (0, k)),       # W1 slab
                pl.BlockSpec((n_hid_chunks, th), lambda i, k: (0, 0)), # b1 (resident)
                pl.BlockSpec((th, n_embd), lambda i, k: (k, 0)),       # W2 slab
                pl.BlockSpec((1, n_embd), lambda i, k: (0, 0)),        # b2 (resident)
            ],
            out_specs=pl.BlockSpec((tm, n_embd), lambda i, k: (i, 0)),
            scratch_shapes=[pltpu.VMEM((tm, n_embd), jnp.float32)],
        ),
        compiler_params=pltpu.CompilerParams(
            dimension_semantics=_DIM_SEMANTICS,
            vmem_limit_bytes=_VMEM_LIMIT,
        ),
        cost_estimate=cost,
    )(x2d, w1, b1_2d, w2, b2_2d)

    return out2d.reshape(batch, seq, n_embd)


# ---------------------------------------------------------------------------
# Reference + self-test
# ---------------------------------------------------------------------------
def _reference(x, w1, b1, w2, b2):
    h = jnp.einsum("bsd,dh->bsh", x, w1) + b1
    h = jax.nn.gelu(h, approximate=False)
    return jnp.einsum("bsh,hd->bsd", h, w2) + b2


def _run_case(key, batch, seq, n_embd, th=None, dtype=jnp.float32,
              atol=2e-4, rtol=2e-4):
    hidden = 4 * n_embd
    kx, k1, k2, k3, k4 = jax.random.split(key, 5)
    x = jax.random.normal(kx, (batch, seq, n_embd), dtype=jnp.float32)
    w1 = jax.random.normal(k1, (n_embd, hidden), dtype=jnp.float32) * 0.02
    b1 = jax.random.normal(k2, (hidden,), dtype=jnp.float32) * 0.02
    w2 = jax.random.normal(k3, (hidden, n_embd), dtype=jnp.float32) * 0.02
    b2 = jax.random.normal(k4, (n_embd,), dtype=jnp.float32) * 0.02

    args = [a.astype(dtype) for a in (x, w1, b1, w2, b2)]
    out = expert_layer(*args, th=th)
    out = jax.block_until_ready(out)

    ref = _reference(*[a.astype(jnp.float32) for a in args])
    assert out.shape == (batch, seq, n_embd)
    assert jnp.allclose(out.astype(jnp.float32), ref, atol=atol, rtol=rtol), \
        "mismatch vs reference"


if __name__ == "__main__":
    key = jax.random.PRNGKey(0)
    k_a, k_b, k_c = jax.random.split(key, 3)

    # Small config matching the module: batch=2, seq=8, n_embd=32 -> hidden=128.
    _run_case(k_a, batch=2, seq=8, n_embd=32)

    # Multi-chunk accumulator (4 hidden chunks) + token count that is not a
    # tile multiple (partial last token tile, no host-side padding / slicing).
    _run_case(k_b, batch=2, seq=13, n_embd=128, th=128)

    # bf16 end-to-end (recommended production dtype); f32 MXU accumulation.
    _run_case(k_c, batch=2, seq=16, n_embd=128, th=128, dtype=jnp.bfloat16,
              atol=3e-2, rtol=3e-2)

    print("KERNEL_OK")
</pallas_src>

<mosaic_0001>
module attributes {stable_mosaic.version = 11 : i64} {
  func.func @_expert_kernel(%arg0: i32, %arg1: i32, %arg2: memref<16x32xf32, #tpu.memory_space<vmem>>, %arg3: memref<32x128xf32, #tpu.memory_space<vmem>>, %arg4: memref<1x128xf32, #tpu.memory_space<vmem>>, %arg5: memref<128x32xf32, #tpu.memory_space<vmem>>, %arg6: memref<1x32xf32, #tpu.memory_space<vmem>>, %arg7: memref<16x32xf32, #tpu.memory_space<vmem>>, %arg8: memref<16x32xf32, #tpu.memory_space<vmem>>) attributes {dimension_semantics = [#tpu.dimension_semantics<parallel>, #tpu.dimension_semantics<arbitrary>], iteration_bounds = array<i64: 1, 1>, scalar_prefetch = 0 : i64, scratch_operands = 1 : i64, tpu.core_type = #tpu.core_type<tc>, window_params = [{transform_indices = @transform_0, window_bounds = array<i64: 16, 32>}, {transform_indices = @transform_1, window_bounds = array<i64: 32, 128>}, {pipeline_mode = #tpu.pipeline_mode<synchronous>, transform_indices = @transform_2, window_bounds = array<i64: 1, 128>}, {transform_indices = @transform_3, window_bounds = array<i64: 128, 32>}, {pipeline_mode = #tpu.pipeline_mode<synchronous>, transform_indices = @transform_4, window_bounds = array<i64: 1, 32>}, {transform_indices = @transform_5, window_bounds = array<i64: 16, 32>}]} {
    %c0_i32 = arith.constant 0 : i32
    %0 = arith.cmpi eq, %arg1, %c0_i32 : i32
    %1 = arith.extui %0 : i1 to i32
    %c0_i32_0 = arith.constant 0 : i32
    %2 = arith.cmpi ne, %1, %c0_i32_0 : i32
    scf.if %2 {
      %cst_18 = arith.constant 0.000000e+00 : f32
      %25 = vector.broadcast %cst_18 : f32 to vector<16x32xf32>
      %c0_19 = arith.constant 0 : index
      %c0_20 = arith.constant 0 : index
      %26 = vector.load %arg8[%c0_19, %c0_20] : memref<16x32xf32, #tpu.memory_space<vmem>>, vector<16x32xf32>
      tpu.vector_store %arg8[%c0_19, %c0_20], %25 {strides = array<i32>} : memref<16x32xf32, #tpu.memory_space<vmem>>, vector<16x32xf32>,
    } else {
    }
    %c0 = arith.constant 0 : index
    %c0_1 = arith.constant 0 : index
    %3 = vector.load %arg2[%c0, %c0_1] : memref<16x32xf32, #tpu.memory_space<vmem>>, vector<16x32xf32>
    %c0_2 = arith.constant 0 : index
    %c0_3 = arith.constant 0 : index
    %4 = vector.load %arg3[%c0_2, %c0_3] : memref<32x128xf32, #tpu.memory_space<vmem>>, vector<32x128xf32>
    %cst = arith.constant dense<0.000000e+00> : vector<16x128xf32>
    %5 = tpu.matmul %3, %4, %cst {dimension_numbers = #tpu.dot_dimension_numbers<[1], [0], [0], [1], [0, 0, 1, 1], [], []>} : vector<16x32xf32>, vector<32x128xf32>, vector<16x128xf32> -> vector<16x128xf32>
    %c0_4 = arith.constant 0 : index
    %c0_5 = arith.constant 0 : index
    %6 = vector.load %arg4[%c0_4, %c0_5] : memref<1x128xf32, #tpu.memory_space<vmem>>, vector<1x128xf32>
    %7 = vector.broadcast %6 : vector<1x128xf32> to vector<16x128xf32>
    %8 = arith.addf %5, %7 : vector<16x128xf32>
    %cst_6 = arith.constant 5.000000e-01 : f32
    %9 = vector.broadcast %cst_6 : f32 to vector<16x128xf32>
    %10 = arith.mulf %9, %8 : vector<16x128xf32>
    %cst_7 = arith.constant 0.707106769 : f32
    %11 = vector.broadcast %cst_7 : f32 to vector<16x128xf32>
    %12 = arith.mulf %8, %11 : vector<16x128xf32>
    %13 = math.erf %12 : vector<16x128xf32>
    %cst_8 = arith.constant 1.000000e+00 : f32
    %14 = vector.broadcast %cst_8 : f32 to vector<16x128xf32>
    %15 = arith.addf %14, %13 : vector<16x128xf32>
    %16 = arith.mulf %10, %15 : vector<16x128xf32>
    %c0_9 = arith.constant 0 : index
    %c0_10 = arith.constant 0 : index
    %17 = vector.load %arg8[%c0_9, %c0_10] : memref<16x32xf32, #tpu.memory_space<vmem>>, vector<16x32xf32>
    %c0_11 = arith.constant 0 : index
    %c0_12 = arith.constant 0 : index
    %18 = vector.load %arg5[%c0_11, %c0_12] : memref<128x32xf32, #tpu.memory_space<vmem>>, vector<128x32xf32>
    %cst_13 = arith.constant dense<0.000000e+00> : vector<16x32xf32>
    %19 = tpu.matmul %16, %18, %cst_13 {dimension_numbers = #tpu.dot_dimension_numbers<[1], [0], [0], [1], [0, 0, 1, 1], [], []>} : vector<16x128xf32>, vector<128x32xf32>, vector<16x32xf32> -> vector<16x32xf32>
    %20 = arith.addf %17, %19 : vector<16x32xf32>
    %c0_14 = arith.constant 0 : index
    %c0_15 = arith.constant 0 : index
    %21 = vector.load %arg8[%c0_14, %c0_15] : memref<16x32xf32, #tpu.memory_space<vmem>>, vector<16x32xf32>
    tpu.vector_store %arg8[%c0_14, %c0_15], %20 {strides = array<i32>} : memref<16x32xf32, #tpu.memory_space<vmem>>, vector<16x32xf32>,
    %c0_i32_16 = arith.constant 0 : i32
    %22 = arith.cmpi eq, %arg1, %c0_i32_16 : i32
    %23 = arith.extui %22 : i1 to i32
    %c0_i32_17 = arith.constant 0 : i32
    %24 = arith.cmpi ne, %23, %c0_i32_17 : i32
    scf.if %24 {
      %c0_18 = arith.constant 0 : index
      %c0_19 = arith.constant 0 : index
      %25 = vector.load %arg8[%c0_18, %c0_19] : memref<16x32xf32, #tpu.memory_space<vmem>>, vector<16x32xf32>
      %c0_20 = arith.constant 0 : index
      %c0_21 = arith.constant 0 : index
      %26 = vector.load %arg6[%c0_20, %c0_21] : memref<1x32xf32, #tpu.memory_space<vmem>>, vector<1x32xf32>
      %27 = vector.broadcast %26 : vector<1x32xf32> to vector<16x32xf32>
      %28 = arith.addf %25, %27 : vector<16x32xf32>
      %c0_22 = arith.constant 0 : index
      %c0_23 = arith.constant 0 : index
      %29 = vector.load %arg7[%c0_22, %c0_23] : memref<16x32xf32, #tpu.memory_space<vmem>>, vector<16x32xf32>
      tpu.vector_store %arg7[%c0_22, %c0_23], %28 {strides = array<i32>} : memref<16x32xf32, #tpu.memory_space<vmem>>, vector<16x32xf32>,
    } else {
    }
    return
  }
  func.func @transform_0(%arg0: i32, %arg1: i32) -> (i32, i32) {
    %c0_i32 = arith.constant 0 : i32
    %c0_i32_0 = arith.constant 0 : i32
    return %arg0, %c0_i32 : i32, i32
  }
  func.func @transform_1(%arg0: i32, %arg1: i32) -> (i32, i32) {
    %c0_i32 = arith.constant 0 : i32
    %c0_i32_0 = arith.constant 0 : i32
    return %c0_i32, %arg1 : i32, i32
  }
  func.func @transform_2(%arg0: i32, %arg1: i32) -> (i32, i32) {
    %c0_i32 = arith.constant 0 : i32
    %c0_i32_0 = arith.constant 0 : i32
    %c0_i32_1 = arith.constant 0 : i32
    return %c0_i32, %c0_i32_0 : i32, i32
  }
  func.func @transform_3(%arg0: i32, %arg1: i32) -> (i32, i32) {
    %c0_i32 = arith.constant 0 : i32
    %c0_i32_0 = arith.constant 0 : i32
    return %arg1, %c0_i32 : i32, i32
  }
  func.func @transform_4(%arg0: i32, %arg1: i32) -> (i32, i32) {
    %c0_i32 = arith.constant 0 : i32
    %c0_i32_0 = arith.constant 0 : i32
    %c0_i32_1 = arith.constant 0 : i32
    return %c0_i32, %c0_i32_0 : i32, i32
  }
  func.func @transform_5(%arg0: i32, %arg1: i32) -> (i32, i32) {
    %c0_i32 = arith.constant 0 : i32
    %c0_i32_0 = arith.constant 0 : i32
    return %arg0, %c0_i32 : i32, i32
  }
}

</mosaic_0001>

<llo_original>
// kernel: expert_layer.1
$region0: #{expert_layer.1}
  #allocation0 [shape = 'u32[]', space=smem, size = 0x4, offset = 0x4, fixed_abs, tag = 'smem constant byte address 0x4 - core index']
  #allocation1 [shape = 'u32[144,128]{1,0:T(1,128)}', space=vmem, size = 0x12000, scoped, tag = 'internal scratch']
  #allocation2 [shape = 'f32[16,32]{1,0:T(8,128)}', space=vmem, size = 0x2000, scoped, tag = 'scratch operand']
  %s0 = inlined_call_operand.vmem [shape: f32[16,32], index: 0, kind: input, shape index: {}]
  %s1 = inlined_call_operand.vmem [shape: f32[32,128], index: 1, kind: input, shape index: {}]
  %s2 = inlined_call_operand.vmem [shape: f32[1,128], index: 2, kind: input, shape index: {}]
  %s3 = inlined_call_operand.vmem [shape: f32[128,32], index: 3, kind: input, shape index: {}]
  %s4 = inlined_call_operand.vmem [shape: f32[1,32], index: 4, kind: input, shape index: {}]
  %s5 = inlined_call_operand.hbm [shape: f32[16,32], index: 5, kind: output, shape index: {}]
  %s6 = sld [smem:[#allocation0]]
  $region38: #{expert_layer.1} parent=0
    _
  %s8 = ssub.s32 1, %s6
  %s9 = scalar_select 0, %s8, %s6
  $region1: #{expert_layer.1} parent=0
    #allocation3 [shape = 'u8[8192]{0}', space=vmem, size = 0x2000, scoped, tag = 'output window, operand 0, single buffered']
    #allocation4 [shape = 's32[1]{0}', space=sflag, size = 0x4, scoped, tag = 'scoped memory for expert_layer.1']
    %10 = vsyncpa [#allocation4], 0
    // Predicated region
    $region2: #{expert_layer.1} parent=1 // pred_check
      _
    $region3: #{expert_layer.1} parent=1 // pred_check_branch
      %12 = sbr.rel (0) target = $region5
    $region4: #{expert_layer.1} parent=1 // pred_region
      _
    $region5: #{expert_layer.1} parent=1 // pred_fallthru
      _
    // Predicated region
    $region6: #{expert_layer.1} parent=1 // pred_check
      _
    $region7: #{expert_layer.1} parent=1 // pred_check_branch
      %14 = sbr.rel (0) target = $region9
    $region8: #{expert_layer.1} parent=1 // pred_region
      _
    $region9: #{expert_layer.1} parent=1 // pred_fallthru
      _
    // Predicated region
    $region10: #{expert_layer.1} parent=1 // pred_check
      _
    $region11: #{expert_layer.1} parent=1 // pred_check_branch
      %16 = sbr.rel (0) target = $region13
    $region12: #{expert_layer.1} parent=1 // pred_region
      _
    $region13: #{expert_layer.1} parent=1 // pred_fallthru
      _
    // Predicated region
    $region14: #{expert_layer.1} parent=1 // pred_check
      _
    $region15: #{expert_layer.1} parent=1 // pred_check_branch
      %18 = sbr.rel (0) target = $region17
    $region16: #{expert_layer.1} parent=1 // pred_region
      _
    $region17: #{expert_layer.1} parent=1 // pred_fallthru
      _
    // Predicated region
    $region18: #{expert_layer.1} parent=1 // pred_check
      _
    $region19: #{expert_layer.1} parent=1 // pred_check_branch
      %20 = sbr.rel (0) target = $region21
    $region20: #{expert_layer.1} parent=1 // pred_region
      _
    $region21: #{expert_layer.1} parent=1 // pred_fallthru
      _
    %p21 = scmp.eq.s32.totalorder 0, 0
    // Predicated region
    $region22: #{expert_layer.1} parent=1 // pred_check
      %p22 = pneg %p21
    $region23: #{expert_layer.1} parent=1 // pred_check_branch
      %24 = sbr.rel (%p22) target = $region25
    $region24: #{expert_layer.1} parent=1 // pred_region
      %vm25 = vcmask 261120
      %26 = vst.msk [vmem:[#allocation2] sm:$0xff] %vm25, 0.0
      %27 = vst.msk [vmem:[#allocation2 + $0x8] sm:$0xff] %vm25, 0.0
    $region25: #{expert_layer.1} parent=1 // pred_fallthru
      _
    %v28 = vld [vmem:[%s0] sm:$0xff]
    %v29 = vld [vmem:[%s0 + $0x8] sm:$0xff]
    %v30 = vld [vmem:[%s1] sm:$0xff]
    %v31 = vld [vmem:[%s1 + $0x8] sm:$0xff]
    %v32 = vld [vmem:[%s1 + $0x10] sm:$0xff]
    %v33 = vld [vmem:[%s1 + $0x18] sm:$0xff]
    %v34 = vld [vmem:[%s2] sm:$0x1]
    %v36 = vlaneseq
    %v37 = vshrl.u32 %v36, 7
    %v38 = vsub.s32 0, %v37
    %v39 = vrot.slane %v34, %v38
    %vm41 = vcmask 261120
    %v43 = vsel %vm41, %v28, 0
    %v46 = vsel %vm41, %v29, 0
    %48 = vmatprep.subr.mxu0 0.0
    %49 = vmatpush1.msra.mxu0 %v30
    %50 = vmatprep.subr.mxu0 0.0
    %51 = vmatpush1.msra.mxu0 %v31
    %52 = vmatprep.subr.mxu0 0.0
    %53 = vmatpush1.msra.mxu0 %v32
    %54 = vmatprep.subr.mxu0 0.0
    %55 = vmatpush1.msra.mxu0 %v33
    %56 = vmatprep.subr.mxu0 0.0
    %57 = vmatpush1.msra.mxu0 0.0
    %58 = vmatprep.subr.mxu0 0.0
    %59 = vmatpush1.msra.mxu0 0.0
    %60 = vmatprep.subr.mxu0 0.0
    %61 = vmatpush1.msra.mxu0 0.0
    %62 = vmatprep.subr.mxu0 0.0
    %63 = vmatpush1.msra.mxu0 0.0
    %64 = vmatprep.subr.mxu0 0.0
    %65 = vmatpush1.msra.mxu0 0.0
    %66 = vmatprep.subr.mxu0 0.0
    %67 = vmatpush1.msra.mxu0 0.0
    %68 = vmatprep.subr.mxu0 0.0
    %69 = vmatpush1.msra.mxu0 0.0
    %70 = vmatprep.subr.mxu0 0.0
    %71 = vmatpush1.msra.mxu0 0.0
    %72 = vmatprep.subr.mxu0 0.0
    %73 = vmatpush1.msra.mxu0 0.0
    %74 = vmatprep.subr.mxu0 0.0
    %75 = vmatpush1.msra.mxu0 0.0
    %76 = vmatprep.subr.mxu0 0.0
    %77 = vmatpush1.msra.mxu0 0.0
    %78 = vmatprep.subr.mxu0 0.0
    %79 = vmatpush1.msra.mxu0 0.0
    %80 = vmatprep.subr.mxu0 0.0
    %81 = vmatpush1.msra.mxu0 0.0
    %82 = vmatprep.subr.mxu0 0.0
    %83 = vmatpush1.msra.mxu0 0.0
    %84 = vmatprep.subr.mxu0 0.0
    %85 = vmatpush1.msra.mxu0 0.0
    %86 = vmatprep.subr.mxu0 0.0
    %87 = vmatpush1.msra.mxu0 0.0
    %88 = vmatprep.subr.mxu0 0.0
    %89 = vmatpush1.msra.mxu0 0.0
    %90 = vmatprep.subr.mxu0 0.0
    %91 = vmatpush1.msra.mxu0 0.0
    %92 = vmatprep.subr.mxu0 0.0
    %93 = vmatpush1.msra.mxu0 0.0
    %94 = vmatprep.subr.mxu0 0.0
    %95 = vmatpush1.msra.mxu0 0.0
    %96 = vmatprep.subr.mxu0 0.0
    %97 = vmatpush1.msra.mxu0 0.0
    %98 = vmatprep.subr.mxu0 0.0
    %99 = vmatpush1.msra.mxu0 0.0
    %100 = vmatprep.subr.mxu0 0.0
    %101 = vmatpush1.msra.mxu0 0.0
    %102 = vmatprep.subr.mxu0 0.0
    %103 = vmatpush1.msra.mxu0 0.0
    %104 = vmatprep.subr.mxu0 0.0
    %105 = vmatpush1.msra.mxu0 0.0
    %106 = vmatprep.subr.mxu0 0.0
    %107 = vmatpush1.msra.mxu0 0.0
    %108 = vmatprep.subr.mxu0 0.0
    %109 = vmatpush1.msra.mxu0 0.0
    %110 = vmatprep.subr.mxu0 0.0
    %111 = vmatpush1.msra.mxu0 0.0
    %112 = vmatprep.mubr.f32.mxu0 0.0
    %113 = vmatmul.mubr.f32.gmra.mrb[0].mxu0 %v43
    %v114 = vpop.f32.mrb[0].mxu0
    %v115 = vadd.f32 %v39, %v114
    %v116 = vpop.f32.mrb[0].mxu0
    %117 = vmatprep.mubr.f32.mxu0 0.0
    %118 = vmatmul.mubr.f32.gmra.mrb[0].mxu0 %v46
    %v119 = vpop.f32.mrb[0].mxu0
    %v120 = vadd.f32 %v39, %v119
    %v121 = vpop.f32.mrb[0].mxu0
    %122 = vdwg.mxu0
    %v123 = vmul.f32 %v115, 0.5
    %v124 = vmul.f32 %v120, 0.5
    %v125 = vmul.f32 %v115, 0.70710677
    %v126 = vmul.f32 %v120, 0.70710677
    %v127 = verf.f32.pop %v125
    %v128 = verf.f32.pop %v126
    %v129 = vadd.f32 %v127, 1.0
    %v130 = vadd.f32 %v128, 1.0
    %v131 = vmul.f32 %v123, %v129
    %v132 = vmul.f32 %v124, %v130
    %v133 = vld [vmem:[#allocation2] sm:$0xff]
    %v134 = vld [vmem:[#allocation2 + $0x8] sm:$0xff]
    %v135 = vld [vmem:[%s3] sm:$0xff]
    %v136 = vld [vmem:[%s3 + $0x8] sm:$0xff]
    %v137 = vld [vmem:[%s3 + $0x10] sm:$0xff]
    %v138 = vld [vmem:[%s3 + $0x18] sm:$0xff]
    %v139 = vld [vmem:[%s3 + $0x20] sm:$0xff]
    %v140 = vld [vmem:[%s3 + $0x28] sm:$0xff]
    %v141 = vld [vmem:[%s3 + $0x30] sm:$0xff]
    %v142 = vld [vmem:[%s3 + $0x38] sm:$0xff]
    %v143 = vld [vmem:[%s3 + $0x40] sm:$0xff]
    %v144 = vld [vmem:[%s3 + $0x48] sm:$0xff]
    %v145 = vld [vmem:[%s3 + $0x50] sm:$0xff]
    %v146 = vld [vmem:[%s3 + $0x58] sm:$0xff]
    %v147 = vld [vmem:[%s3 + $0x60] sm:$0xff]
    %v148 = vld [vmem:[%s3 + $0x68] sm:$0xff]
    %v149 = vld [vmem:[%s3 + $0x70] sm:$0xff]
    %v150 = vld [vmem:[%s3 + $0x78] sm:$0xff]
    %151 = vmatprep.subr.mxu0 0.0
    %152 = vmatpush1.msra.mxu0 %v135
    %153 = vmatprep.subr.mxu0 0.0
    %154 = vmatpush1.msra.mxu0 %v136
    %155 = vmatprep.subr.mxu0 0.0
    %156 = vmatpush1.msra.mxu0 %v137
    %157 = vmatprep.subr.mxu0 0.0
    %158 = vmatpush1.msra.mxu0 %v138
    %159 = vmatprep.subr.mxu0 0.0
    %160 = vmatpush1.msra.mxu0 %v139
    %161 = vmatprep.subr.mxu0 0.0
    %162 = vmatpush1.msra.mxu0 %v140
    %163 = vmatprep.subr.mxu0 0.0
    %164 = vmatpush1.msra.mxu0 %v141
    %165 = vmatprep.subr.mxu0 0.0
    %166 = vmatpush1.msra.mxu0 %v142
    %167 = vmatprep.subr.mxu0 0.0
    %168 = vmatpush1.msra.mxu0 %v143
    %169 = vmatprep.subr.mxu0 0.0
    %170 = vmatpush1.msra.mxu0 %v144
    %171 = vmatprep.subr.mxu0 0.0
    %172 = vmatpush1.msra.mxu0 %v145
    %173 = vmatprep.subr.mxu0 0.0
    %174 = vmatpush1.msra.mxu0 %v146
    %175 = vmatprep.subr.mxu0 0.0
    %176 = vmatpush1.msra.mxu0 %v147
    %177 = vmatprep.subr.mxu0 0.0
    %178 = vmatpush1.msra.mxu0 %v148
    %179 = vmatprep.subr.mxu0 0.0
    %180 = vmatpush1.msra.mxu0 %v149
    %181 = vmatprep.subr.mxu0 0.0
    %182 = vmatpush1.msra.mxu0 %v150
    %183 = vmatprep.subr.mxu0 0.0
    %184 = vmatpush1.msra.mxu0 0.0
    %185 = vmatprep.subr.mxu0 0.0
    %186 = vmatpush1.msra.mxu0 0.0
    %187 = vmatprep.subr.mxu0 0.0
    %188 = vmatpush1.msra.mxu0 0.0
    %189 = vmatprep.subr.mxu0 0.0
    %190 = vmatpush1.msra.mxu0 0.0
    %191 = vmatprep.subr.mxu0 0.0
    %192 = vmatpush1.msra.mxu0 0.0
    %193 = vmatprep.subr.mxu0 0.0
    %194 = vmatpush1.msra.mxu0 0.0
    %195 = vmatprep.subr.mxu0 0.0
    %196 = vmatpush1.msra.mxu0 0.0
    %197 = vmatprep.subr.mxu0 0.0
    %198 = vmatpush1.msra.mxu0 0.0
    %199 = vmatprep.subr.mxu0 0.0
    %200 = vmatpush1.msra.mxu0 0.0
    %201 = vmatprep.subr.mxu0 0.0
    %202 = vmatpush1.msra.mxu0 0.0
    %203 = vmatprep.subr.mxu0 0.0
    %204 = vmatpush1.msra.mxu0 0.0
    %205 = vmatprep.subr.mxu0 0.0
    %206 = vmatpush1.msra.mxu0 0.0
    %207 = vmatprep.subr.mxu0 0.0
    %208 = vmatpush1.msra.mxu0 0.0
    %209 = vmatprep.subr.mxu0 0.0
    %210 = vmatpush1.msra.mxu0 0.0
    %211 = vmatprep.subr.mxu0 0.0
    %212 = vmatpush1.msra.mxu0 0.0
    %213 = vmatprep.subr.mxu0 0.0
    %214 = vmatpush1.msra.mxu0 0.0
    %215 = vmatprep.mubr.f32.mxu0 0.0
    %216 = vmatmul.mubr.f32.gmra.mrb[0].mxu0 %v131
    %v217 = vpop.f32.mrb[0].mxu0
    %v218 = vadd.f32 0.0, %v217
    %v219 = vpop.f32.mrb[0].mxu0
    %220 = vmatprep.mubr.f32.mxu0 0.0
    %221 = vmatmul.mubr.f32.gmra.mrb[0].mxu0 %v132
    %v222 = vpop.f32.mrb[0].mxu0
    %v223 = vadd.f32 0.0, %v222
    %v224 = vpop.f32.mrb[0].mxu0
    %225 = vdwg.mxu0
    %v226 = vadd.f32 %v133, %v218
    %v227 = vadd.f32 %v134, %v223
    %228 = vst.msk [vmem:[#allocation2] sm:$0xff] %vm41, %v226
    %229 = vst.msk [vmem:[#allocation2 + $0x8] sm:$0xff] %vm41, %v227
    // Predicated region
    $region26: #{expert_layer.1} parent=1 // pred_check
      %p230 = pneg %p21
    $region27: #{expert_layer.1} parent=1 // pred_check_branch
      %232 = sbr.rel (%p230) target = $region29
    $region28: #{expert_layer.1} parent=1 // pred_region
      %v233 = vld [vmem:[#allocation2] sm:$0xff]
      %v234 = vld [vmem:[#allocation2 + $0x8] sm:$0xff]
      %v235 = vld [vmem:[%s4] sm:$0x1]
      %v237 = vlaneseq
      %v238 = vshrl.u32 %v237, 7
      %v239 = vsub.s32 0, %v238
      %v240 = vrot.slane %v235, %v239
      %v242 = vadd.f32 %v233, %v240
      %v243 = vadd.f32 %v234, %v240
      %244 = vst.msk [vmem:[#allocation3] sm:$0xff] %vm41, %v242
      %245 = vst.msk [vmem:[#allocation3 + $0x8] sm:$0xff] %vm41, %v243
    $region29: #{expert_layer.1} parent=1 // pred_fallthru
      _
    // Predicated region
    $region30: #{expert_layer.1} parent=1 // pred_check
      _
    $region31: #{expert_layer.1} parent=1 // pred_check_branch
      %247 = sbr.rel (0) target = $region33
    $region32: #{expert_layer.1} parent=1 // pred_region
      %s249 = ssub.s32 256, 256
      %250 = vsyncadd [#allocation4], %s249
      %s251 = sshll.u32 [#allocation3], 4
      %s252 = int_to_ptr.vmem [resolvable:$true] %s251
      %257 = dma.vmem_to_hbm [thread:$0]  %s252, 256, %s5, [#allocation4], 128, 128, 8
    $region33: #{expert_layer.1} parent=1 // pred_fallthru
      _
    // Predicated region
    $region34: #{expert_layer.1} parent=1 // pred_check
      _
    $region35: #{expert_layer.1} parent=1 // pred_check_branch
      %259 = sbr.rel (0) target = $region37
    $region36: #{expert_layer.1} parent=1 // pred_region
      %260 = dma.done [#allocation4], 256
    $region37: #{expert_layer.1} parent=1 // pred_fallthru
      _
    %261 = vsyncpa [#allocation4], 1

</llo_original>
